<compile_context>
chip_gen: v5e
topology: v5e:2x2
jax: 0.10.0
libtpu: 0.0.40
codegen_flags: <defaults>
</compile_context>

<pallas_src>
import functools

import numpy as np
import jax
import jax.numpy as jnp
from jax import lax
from jax.experimental import pallas as pl
from jax.experimental.pallas import tpu as pltpu


# --------------------------------------------------------------------------- #
# Fused kernel: one batch tile per grid step
# --------------------------------------------------------------------------- #
def _regda_fused_kernel(y_ref, yadv_ref, w_ref, out_ref, *, mode, width, sigma):
    y = y_ref[...].astype(jnp.float32)        # (Bt, K, HW) main-head prediction
    yadv = yadv_ref[...].astype(jnp.float32)  # (Bt, K, HW) adversarial head
    w = w_ref[...]                            # (Bt, K, 1)  f32 instance weights
    Bt, K, HW = y.shape

    # ---- get_max_preds: first argmax over the flattened spatial (lane) axis --
    pos = lax.broadcasted_iota(jnp.int32, (Bt, K, HW), 2)
    maxv = jnp.max(y, axis=-1, keepdims=True)                   # (Bt,K,1)
    idx = jnp.min(jnp.where(y == maxv, pos, HW), axis=-1, keepdims=True)
    valid = maxv > 0.0                                          # pred_mask

    if (width & (width - 1)) == 0:          # static python branch
        wshift = width.bit_length() - 1
        wmask = width - 1
        idx_x, idx_y = idx & wmask, idx >> wshift
        col, row = pos & wmask, pos >> wshift
    else:
        idx_x, idx_y = idx % width, idx // width
        col, row = pos % width, pos // width
    mu_x = jnp.where(valid, idx_x, 0)
    mu_y = jnp.where(valid, idx_y, 0)

    # ---- analytic truncated Gaussian == heatmaps[mu_x][mu_y] -----------------
    dx = col - mu_x
    dy = row - mu_y
    dx2 = dx * dx
    dy2 = dy * dy
    t2 = (3 * sigma) * (3 * sigma)
    in_box = (dx2 <= t2) & (dy2 <= t2)
    log_g = (dx2 + dy2).astype(jnp.float32) * (-1.0 / (2.0 * sigma * sigma))
    gt = jnp.where(in_box, jnp.exp(log_g), 0.0)                 # (Bt,K,HW)

    if mode == "min":
        target = gt
        ent = gt * log_g                      # t*log(t); exact 0 outside the box
    else:
        # ground_false = clip(gt^T (1-I), 0, 1)^T == clip(colsum_K(gt) - gt, 0, 1)
        colsum = jnp.sum(gt, axis=1, keepdims=True)             # (Bt,1,HW)
        target = jnp.clip(colsum - gt, 0.0, 1.0)
        ent = target * jnp.log(jnp.maximum(target, 1e-30))      # 0*log(tiny) == 0

    # ---- fused JointsKLLoss: sum(kl) = sum(ent) - sum(t*z) + lse*sum(t) ------
    m = jnp.max(yadv, axis=-1, keepdims=True)
    z = yadv - m
    lse = jnp.log(jnp.sum(jnp.exp(z), axis=-1, keepdims=True))  # (Bt,K,1)
    sum_t = jnp.sum(target, axis=-1, keepdims=True)
    sum_tz = jnp.sum(target * z, axis=-1, keepdims=True)
    sum_ent = jnp.sum(ent, axis=-1, keepdims=True)
    loss_bk = sum_ent - sum_tz + lse * sum_t                    # (Bt,K,1)

    partial = jnp.sum(loss_bk * w)                              # scalar
    out_ref[...] = jnp.broadcast_to(partial, out_ref.shape).astype(jnp.float32)


# --------------------------------------------------------------------------- #
# Module wrapper
# --------------------------------------------------------------------------- #
def _tpu_vmem_capacity_bytes():
    try:
        return int(pltpu.get_tpu_info().vmem_capacity_bytes)
    except Exception:
        return 64 * 1024 * 1024  # conservative fallback (v7x per-TC VMEM)


class RegressionDisparityPallas:
    """JAX/Pallas port of RegressionDisparity(PseudoLabelGenerator2d, JointsKLLoss).

    The Gaussian pseudo-label is generated analytically inside the kernel
    (numerically identical to the precomputed template table of the PyTorch
    module), so no (W*H, H, W) table and no gather pass are needed.
    """

    # TODO(synk): the PyTorch module also stores self.ground_truth / self.ground_false
    # as side-effect tensors; they are not materialized here — only the scalar loss.

    def __init__(self, num_keypoints, height=64, width=64, sigma=2, batch_tile=None):
        self.num_keypoints = num_keypoints
        self.height = height
        self.width = width
        self.sigma = sigma
        vmem_cap = _tpu_vmem_capacity_bytes()
        # Never request the full physical VMEM (v7x has only 64 MiB per TC).
        self.vmem_limit = (96 if vmem_cap >= 128 * 1024 * 1024 else 48) * 1024 * 1024
        if batch_tile is None:
            batch_tile = 16 if vmem_cap >= 128 * 1024 * 1024 else 8
        self.batch_tile = batch_tile

    def _pick_batch_tile(self, B, K, HW, in_itemsize):
        # Rough per-batch-element VMEM bytes: two double-buffered input tiles plus
        # ~8 live f32/int32 (K_pad, HW) temporaries inside the kernel body.
        k_pad = -(-K // 8) * 8
        per_b = k_pad * HW * (2 * in_itemsize * 2 + 8 * 4)
        budget = int(0.8 * self.vmem_limit)
        cap = max(1, min(self.batch_tile, budget // max(per_b, 1)))
        divisors = [d for d in range(1, B + 1) if B % d == 0 and d <= cap]
        if not divisors:
            divisors = [1]
        # Prefer >= 2 grid blocks so the "parallel" batch axis can use both
        # TensorCores on v7x; otherwise take the largest fitting divisor.
        multi = [d for d in divisors if B // d >= 2]
        return max(multi) if multi else max(divisors)

    def __call__(self, y, y_adv, weight=None, mode="min"):
        assert mode in ("min", "max")
        B, K, H, W = y.shape
        assert K == self.num_keypoints and H == self.height and W == self.width
        HW = H * W

        # Lane-dense layout: flatten spatial dims. Keep the native dtype (bf16
        # stays bf16 across HBM/DMA; the upcast happens inside the kernel).
        y2 = y.reshape(B, K, HW)
        yadv2 = y_adv.reshape(B, K, HW)
        if weight is None:
            w3 = jnp.ones((B, K, 1), jnp.float32)
        else:
            w3 = weight.reshape(B, K, 1).astype(jnp.float32)

        Bt = self._pick_batch_tile(B, K, HW, y2.dtype.itemsize)
        nblocks = B // Bt

        kernel = functools.partial(_regda_fused_kernel, mode=mode,
                                   width=W, sigma=self.sigma)

        partials = pl.pallas_call(
            kernel,
            out_shape=jax.ShapeDtypeStruct((nblocks, 1, 128), jnp.float32),
            grid=(nblocks,),
            in_specs=[pl.BlockSpec((Bt, K, HW), lambda b: (b, 0, 0)),
                      pl.BlockSpec((Bt, K, HW), lambda b: (b, 0, 0)),
                      pl.BlockSpec((Bt, K, 1), lambda b: (b, 0, 0))],
            out_specs=pl.BlockSpec((1, 1, 128), lambda b: (b, 0, 0)),
            compiler_params=pltpu.CompilerParams(
                dimension_semantics=("parallel",),
                vmem_limit_bytes=self.vmem_limit),
        )(y2, yadv2, w3)

        # JointsKLLoss(reduction='mean') over all (B, K) entries.
        return jnp.sum(partials[:, 0, 0]) / (B * K)


# --------------------------------------------------------------------------- #
# NumPy reference (mirrors the PyTorch module, table-based) for a silent check
# --------------------------------------------------------------------------- #
def _numpy_reference(y, y_adv, weight, mode, height, width, sigma):
    y = np.asarray(y, np.float32)
    y_adv = np.asarray(y_adv, np.float32)
    B, K, H, W = y.shape

    heatmaps = np.zeros((width, height, height, width), dtype=np.float32)
    tmp_size = sigma * 3
    for mu_x in range(width):
        for mu_y in range(height):
            ul = [int(mu_x - tmp_size), int(mu_y - tmp_size)]
            br = [int(mu_x + tmp_size + 1), int(mu_y + tmp_size + 1)]
            size = 2 * tmp_size + 1
            x = np.arange(0, size, 1, np.float32)
            yy = x[:, np.newaxis]
            x0 = y0 = size // 2
            g = np.exp(-((x - x0) ** 2 + (yy - y0) ** 2) / (2 * sigma ** 2))
            g_x = (max(0, -ul[0]), min(br[0], width) - ul[0])
            g_y = (max(0, -ul[1]), min(br[1], height) - ul[1])
            img_x = (max(0, ul[0]), min(br[0], width))
            img_y = (max(0, ul[1]), min(br[1], height))
            heatmaps[mu_x][mu_y][img_y[0]:img_y[1], img_x[0]:img_x[1]] = \
                g[g_y[0]:g_y[1], g_x[0]:g_x[1]]
    false_matrix = 1.0 - np.eye(K, dtype=np.float32)

    hm = y.reshape(B, K, -1)
    idx = np.argmax(hm, axis=2)
    maxvals = np.amax(hm, axis=2)
    mask = (maxvals > 0.0)
    mu_x_a = ((idx % W) * mask).astype(int).reshape(-1)
    mu_y_a = ((idx // W) * mask).astype(int).reshape(-1)
    gt = heatmaps[mu_x_a, mu_y_a].reshape(B, K, H, W)

    if mode == "min":
        target = gt
    else:
        gf = gt.reshape(B, K, -1).transpose(0, 2, 1).dot(false_matrix)
        target = gf.clip(0.0, 1.0).transpose(0, 2, 1).reshape(B, K, H, W)

    pred = y_adv.reshape(B, K, -1).astype(np.float64)
    t = target.reshape(B, K, -1).astype(np.float64)
    m = pred.max(axis=-1, keepdims=True)
    z = pred - m
    logp = z - np.log(np.exp(z).sum(-1, keepdims=True))
    ent = np.where(t > 0, t * np.log(np.maximum(t, 1e-300)), 0.0)
    loss = (ent - t * logp).sum(-1)
    if weight is not None:
        loss = loss * np.asarray(weight, np.float64)
    return float(loss.mean())


if __name__ == "__main__":
    B, K, H, W = 2, 4, 32, 32
    key = jax.random.PRNGKey(0)
    k1, k2, k3 = jax.random.split(key, 3)
    y = jax.random.normal(k1, (B, K, H, W), dtype=jnp.float32)
    y_adv = jax.random.normal(k2, (B, K, H, W), dtype=jnp.float32)
    weight = jax.random.uniform(k3, (B, K), dtype=jnp.float32)

    reg_disp = RegressionDisparityPallas(num_keypoints=K, height=H, width=W, sigma=2)

    loss_min = reg_disp(y, y_adv, weight=None, mode="min")
    loss_max = reg_disp(y, y_adv, weight=weight, mode="max")
    jax.block_until_ready(loss_min)
    jax.block_until_ready(loss_max)

    # silent correctness check against the NumPy/PyTorch-equivalent reference
    ref_min = _numpy_reference(y, y_adv, None, "min", H, W, 2)
    ref_max = _numpy_reference(y, y_adv, weight, "max", H, W, 2)
    np.testing.assert_allclose(float(loss_min), ref_min, rtol=2e-3, atol=1e-3)
    np.testing.assert_allclose(float(loss_max), ref_max, rtol=2e-3, atol=1e-3)

    print("KERNEL_OK")
</pallas_src>

<mosaic_0001>
module attributes {stable_mosaic.version = 11 : i64} {
  func.func @_regda_fused_kernel(%arg0: i32, %arg1: memref<1x4x1024xf32, #tpu.memory_space<vmem>>, %arg2: memref<1x4x1024xf32, #tpu.memory_space<vmem>>, %arg3: memref<1x4x1xf32, #tpu.memory_space<vmem>>, %arg4: memref<1x1x128xf32, #tpu.memory_space<vmem>>) attributes {dimension_semantics = [#tpu.dimension_semantics<parallel>], iteration_bounds = array<i64: 2>, scalar_prefetch = 0 : i64, scratch_operands = 0 : i64, tpu.core_type = #tpu.core_type<tc>, window_params = [{transform_indices = @transform_0, window_bounds = array<i64: 1, 4, 1024>}, {transform_indices = @transform_1, window_bounds = array<i64: 1, 4, 1024>}, {transform_indices = @transform_2, window_bounds = array<i64: 1, 4, 1>}, {transform_indices = @transform_3, window_bounds = array<i64: 1, 1, 128>}]} {
    %c0 = arith.constant 0 : index
    %c0_0 = arith.constant 0 : index
    %c0_1 = arith.constant 0 : index
    %0 = vector.load %arg1[%c0, %c0_0, %c0_1] : memref<1x4x1024xf32, #tpu.memory_space<vmem>>, vector<1x4x1024xf32>
    %c0_2 = arith.constant 0 : index
    %c0_3 = arith.constant 0 : index
    %c0_4 = arith.constant 0 : index
    %1 = vector.load %arg2[%c0_2, %c0_3, %c0_4] : memref<1x4x1024xf32, #tpu.memory_space<vmem>>, vector<1x4x1024xf32>
    %c0_5 = arith.constant 0 : index
    %c0_6 = arith.constant 0 : index
    %c0_7 = arith.constant 0 : index
    %2 = vector.load %arg3[%c0_5, %c0_6, %c0_7] : memref<1x4x1xf32, #tpu.memory_space<vmem>>, vector<1x4x1xf32>
    %3 = tpu.iota {dimensions = array<i32: 2>} : vector<1x4x1024xi32>
    %cst = arith.constant dense<0xFF800000> : vector<1x4xf32>
    %4 = vector.multi_reduction <maximumf>, %0, %cst [2] : vector<1x4x1024xf32> to vector<1x4xf32>
    %5 = vector.shape_cast %4 : vector<1x4xf32> to vector<1x4x1xf32>
    %6 = vector.broadcast %5 : vector<1x4x1xf32> to vector<1x4x1024xf32>
    %7 = arith.cmpf oeq, %0, %6 : vector<1x4x1024xf32>
    %c1024_i32 = arith.constant 1024 : i32
    %8 = vector.broadcast %c1024_i32 : i32 to vector<1x4x1024xi32>
    %9 = arith.select %7, %3, %8 : vector<1x4x1024xi1>, vector<1x4x1024xi32>
    %cst_8 = arith.constant dense<2147483647> : vector<1x4xi32>
    %10 = vector.multi_reduction <minsi>, %9, %cst_8 [2] : vector<1x4x1024xi32> to vector<1x4xi32>
    %11 = vector.shape_cast %10 : vector<1x4xi32> to vector<1x4x1xi32>
    %cst_9 = arith.constant 0.000000e+00 : f32
    %12 = vector.broadcast %cst_9 : f32 to vector<1x4x1xf32>
    %13 = arith.cmpf ogt, %5, %12 : vector<1x4x1xf32>
    %c31_i32 = arith.constant 31 : i32
    %14 = vector.broadcast %c31_i32 : i32 to vector<1x4x1xi32>
    %15 = arith.andi %11, %14 : vector<1x4x1xi32>
    %c5_i32 = arith.constant 5 : i32
    %16 = vector.broadcast %c5_i32 : i32 to vector<1x4x1xi32>
    %17 = arith.shrsi %11, %16 : vector<1x4x1xi32>
    %c31_i32_10 = arith.constant 31 : i32
    %18 = vector.broadcast %c31_i32_10 : i32 to vector<1x4x1024xi32>
    %19 = arith.andi %3, %18 : vector<1x4x1024xi32>
    %c5_i32_11 = arith.constant 5 : i32
    %20 = vector.broadcast %c5_i32_11 : i32 to vector<1x4x1024xi32>
    %21 = arith.shrsi %3, %20 : vector<1x4x1024xi32>
    %c0_i32 = arith.constant 0 : i32
    %22 = vector.broadcast %c0_i32 : i32 to vector<1x4x1xi32>
    %23 = arith.select %13, %15, %22 : vector<1x4x1xi1>, vector<1x4x1xi32>
    %c0_i32_12 = arith.constant 0 : i32
    %24 = vector.broadcast %c0_i32_12 : i32 to vector<1x4x1xi32>
    %25 = arith.select %13, %17, %24 : vector<1x4x1xi1>, vector<1x4x1xi32>
    %26 = vector.broadcast %23 : vector<1x4x1xi32> to vector<1x4x1024xi32>
    %27 = arith.subi %19, %26 : vector<1x4x1024xi32>
    %28 = vector.broadcast %25 : vector<1x4x1xi32> to vector<1x4x1024xi32>
    %29 = arith.subi %21, %28 : vector<1x4x1024xi32>
    %30 = arith.muli %27, %27 : vector<1x4x1024xi32>
    %31 = arith.muli %29, %29 : vector<1x4x1024xi32>
    %c36_i32 = arith.constant 36 : i32
    %32 = vector.broadcast %c36_i32 : i32 to vector<1x4x1024xi32>
    %33 = arith.cmpi sle, %30, %32 : vector<1x4x1024xi32>
    %c36_i32_13 = arith.constant 36 : i32
    %34 = vector.broadcast %c36_i32_13 : i32 to vector<1x4x1024xi32>
    %35 = arith.cmpi sle, %31, %34 : vector<1x4x1024xi32>
    %36 = arith.andi %33, %35 : vector<1x4x1024xi1>
    %37 = arith.addi %30, %31 : vector<1x4x1024xi32>
    %38 = arith.sitofp %37 : vector<1x4x1024xi32> to vector<1x4x1024xf32>
    %cst_14 = arith.constant -1.250000e-01 : f32
    %39 = vector.broadcast %cst_14 : f32 to vector<1x4x1024xf32>
    %40 = arith.mulf %38, %39 : vector<1x4x1024xf32>
    %41 = math.exp %40 : vector<1x4x1024xf32>
    %cst_15 = arith.constant 0.000000e+00 : f32
    %42 = vector.broadcast %cst_15 : f32 to vector<1x4x1024xf32>
    %43 = arith.select %36, %41, %42 : vector<1x4x1024xi1>, vector<1x4x1024xf32>
    %44 = arith.mulf %43, %40 : vector<1x4x1024xf32>
    %cst_16 = arith.constant dense<0xFF800000> : vector<1x4xf32>
    %45 = vector.multi_reduction <maximumf>, %1, %cst_16 [2] : vector<1x4x1024xf32> to vector<1x4xf32>
    %46 = vector.shape_cast %45 : vector<1x4xf32> to vector<1x4x1xf32>
    %47 = vector.broadcast %46 : vector<1x4x1xf32> to vector<1x4x1024xf32>
    %48 = arith.subf %1, %47 : vector<1x4x1024xf32>
    %49 = math.exp %48 : vector<1x4x1024xf32>
    %cst_17 = arith.constant dense<0.000000e+00> : vector<1x4xf32>
    %50 = vector.multi_reduction <add>, %49, %cst_17 [2] : vector<1x4x1024xf32> to vector<1x4xf32>
    %51 = vector.shape_cast %50 : vector<1x4xf32> to vector<1x4x1xf32>
    %52 = math.log %51 : vector<1x4x1xf32>
    %cst_18 = arith.constant dense<0.000000e+00> : vector<1x4xf32>
    %53 = vector.multi_reduction <add>, %43, %cst_18 [2] : vector<1x4x1024xf32> to vector<1x4xf32>
    %54 = vector.shape_cast %53 : vector<1x4xf32> to vector<1x4x1xf32>
    %55 = arith.mulf %43, %48 : vector<1x4x1024xf32>
    %cst_19 = arith.constant dense<0.000000e+00> : vector<1x4xf32>
    %56 = vector.multi_reduction <add>, %55, %cst_19 [2] : vector<1x4x1024xf32> to vector<1x4xf32>
    %57 = vector.shape_cast %56 : vector<1x4xf32> to vector<1x4x1xf32>
    %cst_20 = arith.constant dense<0.000000e+00> : vector<1x4xf32>
    %58 = vector.multi_reduction <add>, %44, %cst_20 [2] : vector<1x4x1024xf32> to vector<1x4xf32>
    %59 = vector.shape_cast %58 : vector<1x4xf32> to vector<1x4x1xf32>
    %60 = arith.subf %59, %57 : vector<1x4x1xf32>
    %61 = arith.mulf %52, %54 : vector<1x4x1xf32>
    %62 = arith.addf %60, %61 : vector<1x4x1xf32>
    %63 = arith.mulf %62, %2 : vector<1x4x1xf32>
    %64 = vector.shape_cast %63 : vector<1x4x1xf32> to vector<1x1x4x1xf32>
    %cst_21 = arith.constant dense<0.000000e+00> : vector<1xf32>
    %65 = vector.multi_reduction <add>, %64, %cst_21 [1, 2, 3] : vector<1x1x4x1xf32> to vector<1xf32>
    %66 = vector.shape_cast %65 : vector<1xf32> to vector<1x1x1x1xf32>
    %67 = vector.extract %66[0, 0, 0, 0] : f32 from vector<1x1x1x1xf32>
    %68 = vector.broadcast %67 : f32 to vector<1x1x128xf32>
    %c0_22 = arith.constant 0 : index
    %c0_23 = arith.constant 0 : index
    %c0_24 = arith.constant 0 : index
    %69 = vector.load %arg4[%c0_22, %c0_23, %c0_24] : memref<1x1x128xf32, #tpu.memory_space<vmem>>, vector<1x1x128xf32>
    tpu.vector_store %arg4[%c0_22, %c0_23, %c0_24], %68 {strides = array<i32>} : memref<1x1x128xf32, #tpu.memory_space<vmem>>, vector<1x1x128xf32>,
    return
  }
  func.func @transform_0(%arg0: i32) -> (i32, i32, i32) {
    %c0_i32 = arith.constant 0 : i32
    %c0_i32_0 = arith.constant 0 : i32
    %c0_i32_1 = arith.constant 0 : i32
    return %arg0, %c0_i32, %c0_i32_0 : i32, i32, i32
  }
  func.func @transform_1(%arg0: i32) -> (i32, i32, i32) {
    %c0_i32 = arith.constant 0 : i32
    %c0_i32_0 = arith.constant 0 : i32
    %c0_i32_1 = arith.constant 0 : i32
    return %arg0, %c0_i32, %c0_i32_0 : i32, i32, i32
  }
  func.func @transform_2(%arg0: i32) -> (i32, i32, i32) {
    %c0_i32 = arith.constant 0 : i32
    %c0_i32_0 = arith.constant 0 : i32
    %c0_i32_1 = arith.constant 0 : i32
    return %arg0, %c0_i32, %c0_i32_0 : i32, i32, i32
  }
  func.func @transform_3(%arg0: i32) -> (i32, i32, i32) {
    %c0_i32 = arith.constant 0 : i32
    %c0_i32_0 = arith.constant 0 : i32
    %c0_i32_1 = arith.constant 0 : i32
    return %arg0, %c0_i32, %c0_i32_0 : i32, i32, i32
  }
}

</mosaic_0001>

<llo_original>
// kernel: tpu_custom_call.1
$region0: #{tpu_custom_call.1}
  #allocation0 [shape = 'u32[]', space=smem, size = 0x4, offset = 0x4, fixed_abs, tag = 'smem constant byte address 0x4 - core index']
  #allocation1 [shape = 'u32[72,128]{1,0:T(1,128)}', space=vmem, size = 0x9000, scoped, tag = 'internal scratch']
  %s0 = inlined_call_operand.hbm [shape: f32[2,4,1024], index: 0, kind: input, shape index: {}]
  %s1 = inlined_call_operand.hbm [shape: f32[2,4,1024], index: 1, kind: input, shape index: {}]
  %s2 = inlined_call_operand.vmem [shape: f32[2,4,1], index: 2, kind: input, shape index: {}]
  %s3 = inlined_call_operand.hbm [shape: f32[2,1,128], index: 3, kind: output, shape index: {}]
  %s4 = sld [smem:[#allocation0]]
  $region53: #{tpu_custom_call.1} parent=0
    _
  %s6 = ssub.s32 1, %s4
  %s7 = scalar_select 0, %s6, %s4
  $region1: #{tpu_custom_call.1} parent=0
    #allocation2 [shape = 'u8[32768]{0}', space=vmem, size = 0x8000, scoped, tag = 'input window, operand 0']
    #allocation3 [shape = 's32[2]{0}', space=sflag, size = 0x8, scoped, tag = 'scoped memory for tpu_custom_call.1']
    #allocation4 [shape = 's32[2]{0}', space=sflag, size = 0x8, scoped, tag = 'scoped memory for tpu_custom_call.1']
    #allocation5 [shape = 'u8[32768]{0}', space=vmem, size = 0x8000, scoped, tag = 'input window, operand 1']
    #allocation6 [shape = 's32[2]{0}', space=sflag, size = 0x8, scoped, tag = 'scoped memory for tpu_custom_call.1']
    #allocation7 [shape = 'u8[1024]{0}', space=vmem, size = 0x400, scoped, tag = 'output window, operand 0']
    %8 = vsyncpa [#allocation3], 0
    %s9 = scalar_lea.sflag [#allocation3], 1
    %10 = vsyncpa %s9, 0
    %11 = vsyncpa [#allocation6], 0
    %s12 = scalar_lea.sflag [#allocation6], 1
    %13 = vsyncpa %s12, 0
    %14 = vsyncpa [#allocation4], 0
    %s15 = scalar_lea.sflag [#allocation4], 1
    %16 = vsyncpa %s15, 0
    loop: start=0, step=1, limit=4
    $region2: #{tpu_custom_call.1} parent=1 // loop_pre_header
      _
    $region3: #{tpu_custom_call.1} parent=1 // loop_header
      %s18 = sphi 0, %s22
      %p19 = scmp.ge.s32.totalorder %s18, 4
      %s28 = sphi 0, %s30
      %s31 = sphi 0, %s28
      %s32 = sphi 0, %s31
      %s48 = sphi 0, %s32
      %s54 = sphi 0, %s56
      %s57 = sphi 0, %s54
      %s58 = sphi 0, %s57
      %s74 = sphi 0, %s58
      %s80 = sphi 0, %s82
      %s83 = sphi 0, %s80
      %s84 = sphi 0, %s83
      %s100 = sphi 0, %s84
      %s106 = sphi 0, %s108
      %s109 = sphi 0, %s106
      %s110 = sphi 0, %s109
      %s126 = sphi 0, %s110
    $region4: #{tpu_custom_call.1} parent=1 // loop_header_branch
      %21 = sbr.rel (%p19) target = $region8
    $region5: #{tpu_custom_call.1} parent=1 // loop_body
      %s23 = ssub.s32 %s18, 1
      %s24 = ssub.s32 %s18, 2
      %s25 = sadd.s32 %s18, 1
      %s26 = ssub.s32 %s18, %s25
      %p27 = scmp.eq.s32.totalorder %s26, 0
      %s29 = sadd.s32 %s28, 1
      %s30 = scalar_select %p27, %s28, %s29
      %p33 = pneg %p27
      %p34 = scmp.eq.s32.totalorder %s18, 1
      %p35 = por %p33, %p34
      %p36 = scmp.ne.s32.totalorder %s28, %s31
      %p37 = scmp.eq.s32.totalorder %s18, 0
      %p38 = por %p36, %p37
      %p39 = scmp.ne.s32.totalorder %s28, %s31
      %p40 = scmp.eq.s32.totalorder %s23, 1
      %p41 = por %p39, %p40
      %p42 = scmp.ne.s32.totalorder %s31, %s32
      %p43 = scmp.eq.s32.totalorder %s23, 0
      %p44 = por %p42, %p43
      %p45 = scmp.ne.s32.totalorder %s31, %s32
      %p46 = scmp.eq.s32.totalorder %s24, 1
      %p47 = por %p45, %p46
      %p49 = scmp.ne.s32.totalorder %s32, %s48
      %p50 = scmp.eq.s32.totalorder %s24, 0
      %p51 = por %p49, %p50
      %s52 = ssub.s32 %s18, %s25
      %p53 = scmp.eq.s32.totalorder %s52, 0
      %s55 = sadd.s32 %s54, 1
      %s56 = scalar_select %p53, %s54, %s55
      %p59 = pneg %p53
      %p60 = scmp.eq.s32.totalorder %s18, 1
      %p61 = por %p59, %p60
      %p62 = scmp.ne.s32.totalorder %s54, %s57
      %p63 = scmp.eq.s32.totalorder %s18, 0
      %p64 = por %p62, %p63
      %p65 = scmp.ne.s32.totalorder %s54, %s57
      %p66 = scmp.eq.s32.totalorder %s23, 1
      %p67 = por %p65, %p66
      %p68 = scmp.ne.s32.totalorder %s57, %s58
      %p69 = scmp.eq.s32.totalorder %s23, 0
      %p70 = por %p68, %p69
      %p71 = scmp.ne.s32.totalorder %s57, %s58
      %p72 = scmp.eq.s32.totalorder %s24, 1
      %p73 = por %p71, %p72
      %p75 = scmp.ne.s32.totalorder %s58, %s74
      %p76 = scmp.eq.s32.totalorder %s24, 0
      %p77 = por %p75, %p76
      %s78 = ssub.s32 %s18, %s25
      %p79 = scmp.eq.s32.totalorder %s78, 0
      %s81 = sadd.s32 %s80, 1
      %s82 = scalar_select %p79, %s80, %s81
      %p85 = pneg %p79
      %p86 = scmp.eq.s32.totalorder %s18, 1
      %p87 = por %p85, %p86
      %p88 = scmp.ne.s32.totalorder %s80, %s83
      %p89 = scmp.eq.s32.totalorder %s18, 0
      %p90 = por %p88, %p89
      %p91 = scmp.ne.s32.totalorder %s80, %s83
      %p92 = scmp.eq.s32.totalorder %s23, 1
      %p93 = por %p91, %p92
      %p94 = scmp.ne.s32.totalorder %s83, %s84
      %p95 = scmp.eq.s32.totalorder %s23, 0
      %p96 = por %p94, %p95
      %p97 = scmp.ne.s32.totalorder %s83, %s84
      %p98 = scmp.eq.s32.totalorder %s24, 1
      %p99 = por %p97, %p98
      %p101 = scmp.ne.s32.totalorder %s84, %s100
      %p102 = scmp.eq.s32.totalorder %s24, 0
      %p103 = por %p101, %p102
      %s104 = ssub.s32 %s18, %s25
      %p105 = scmp.eq.s32.totalorder %s104, 0
      %s107 = sadd.s32 %s106, 1
      %s108 = scalar_select %p105, %s106, %s107
      %p111 = pneg %p105
      %p112 = scmp.eq.s32.totalorder %s18, 1
      %p113 = por %p111, %p112
      %p114 = scmp.ne.s32.totalorder %s106, %s109
      %p115 = scmp.eq.s32.totalorder %s18, 0
      %p116 = por %p114, %p115
      %p117 = scmp.ne.s32.totalorder %s106, %s109
      %p118 = scmp.eq.s32.totalorder %s23, 1
      %p119 = por %p117, %p118
      %p120 = scmp.ne.s32.totalorder %s109, %s110
      %p121 = scmp.eq.s32.totalorder %s23, 0
      %p122 = por %p120, %p121
      %p123 = scmp.ne.s32.totalorder %s109, %s110
      %p124 = scmp.eq.s32.totalorder %s24, 1
      %p125 = por %p123, %p124
      %p127 = scmp.ne.s32.totalorder %s110, %s126
      %p128 = scmp.eq.s32.totalorder %s24, 0
      %p129 = por %p127, %p128
      %p130 = scmp.le.s32.totalorder 1, %s18
      %p131 = scmp.lt.s32.totalorder %s18, 3
      %p132 = pnand %p130, %p131
      %p133 = pneg %p132
      // Predicated region
      $region9: #{tpu_custom_call.1} parent=5 // pred_check
        _
      $region10: #{tpu_custom_call.1} parent=5 // pred_check_branch
        %135 = sbr.rel (%p132) target = $region12
      $region11: #{tpu_custom_call.1} parent=5 // pred_region
        %s136 = ssub.s32 %s18, 1
      $region12: #{tpu_custom_call.1} parent=5 // pred_fallthru
        _
      %p137 = scmp.lt.s32.totalorder %s18, 2
      // Predicated region
      $region13: #{tpu_custom_call.1} parent=5 // pred_check
        %p138 = pneg %p137
      $region14: #{tpu_custom_call.1} parent=5 // pred_check_branch
        %140 = sbr.rel (%p138) target = $region16
      $region15: #{tpu_custom_call.1} parent=5 // pred_region
        // Predicated region
        $region17: #{tpu_custom_call.1} parent=15 // pred_check
          %p141 = pneg %p38
        $region18: #{tpu_custom_call.1} parent=15 // pred_check_branch
          %143 = sbr.rel (%p141) target = $region20
        $region19: #{tpu_custom_call.1} parent=15 // pred_region
          %s144 = sand.u32 %s28, 1
          %s145 = scalar_lea.sflag [#allocation3], %s144
          %s146 = sand.u32 %s28, 1
          %s147 = smul.addr %s146, 32
          %s148 = scalar_lea.vmem [#allocation2], %s147
          %150 = vsyncadd %s145, 0
          %s151 = smul.addr %s18, 8
          %s152 = smul.addr %s151, 4
          %s153 = scalar_lea.hbm %s0, %s152
          %s155 = sshll.u32 %s153, 4
          %s156 = int_to_ptr.hbm [resolvable:$true] %s155
          %s157 = sshll.u32 %s148, 4
          %s158 = int_to_ptr.vmem [resolvable:$true] %s157
          %160 = dma.hbm_to_vmem [thread:$0]  %s156, 512, %s158, %s145
        $region20: #{tpu_custom_call.1} parent=15 // pred_fallthru
          _
        // Predicated region
        $region21: #{tpu_custom_call.1} parent=15 // pred_check
          %p161 = pneg %p64
        $region22: #{tpu_custom_call.1} parent=15 // pred_check_branch
          %163 = sbr.rel (%p161) target = $region24
        $region23: #{tpu_custom_call.1} parent=15 // pred_region
          %s164 = sand.u32 %s54, 1
          %s165 = scalar_lea.sflag [#allocation6], %s164
          %s166 = sand.u32 %s54, 1
          %s167 = smul.addr %s166, 32
          %s168 = scalar_lea.vmem [#allocation5], %s167
          %170 = vsyncadd %s165, 0
          %s171 = smul.addr %s18, 8
          %s172 = smul.addr %s171, 4
          %s173 = scalar_lea.hbm %s1, %s172
          %s175 = sshll.u32 %s173, 4
          %s176 = int_to_ptr.hbm [resolvable:$true] %s175
          %s177 = sshll.u32 %s168, 4
          %s178 = int_to_ptr.vmem [resolvable:$true] %s177
          %180 = dma.hbm_to_vmem [thread:$0]  %s176, 512, %s178, %s165
        $region24: #{tpu_custom_call.1} parent=15 // pred_fallthru
          _
        // Predicated region
        $region25: #{tpu_custom_call.1} parent=15 // pred_check
          %p181 = pneg %p90
        $region26: #{tpu_custom_call.1} parent=15 // pred_check_branch
          %183 = sbr.rel (%p181) target = $region28
        $region27: #{tpu_custom_call.1} parent=15 // pred_region
          %p184 = scmp.lt.s32.totalorder %s18, 1
          %s185 = scalar_select %p184, %s18, 1
          %s186 = smul.addr %s185, 4
          %s187 = scalar_lea.vmem %s2, %s186
        $region28: #{tpu_custom_call.1} parent=15 // pred_fallthru
          _
      $region16: #{tpu_custom_call.1} parent=5 // pred_fallthru
        _
      %p188 = scmp.le.s32.totalorder 1, %s18
      %p189 = scmp.lt.s32.totalorder %s18, 3
      %p190 = pnand %p188, %p189
      %p191 = pneg %p190
      // Predicated region
      $region29: #{tpu_custom_call.1} parent=5 // pred_check
        _
      $region30: #{tpu_custom_call.1} parent=5 // pred_check_branch
        %193 = sbr.rel (%p190) target = $region32
      $region31: #{tpu_custom_call.1} parent=5 // pred_region
        %s194 = ssub.s32 %s18, 1
        %s195 = sand.u32 %s31, 1
        %s196 = scalar_lea.sflag [#allocation3], %s195
        %s197 = sand.u32 %s31, 1
        %s198 = smul.addr %s197, 32
        %s199 = scalar_lea.vmem [#allocation2], %s198
        // Predicated region
        $region33: #{tpu_custom_call.1} parent=31 // pred_check
          %p200 = pneg %p44
        $region34: #{tpu_custom_call.1} parent=31 // pred_check_branch
          %202 = sbr.rel (%p200) target = $region36
        $region35: #{tpu_custom_call.1} parent=31 // pred_region
          %204 = dma.done %s196, 512
        $region36: #{tpu_custom_call.1} parent=31 // pred_fallthru
          _
        %s205 = sand.u32 %s57, 1
        %s206 = scalar_lea.sflag [#allocation6], %s205
        %s207 = sand.u32 %s57, 1
        %s208 = smul.addr %s207, 32
        %s209 = scalar_lea.vmem [#allocation5], %s208
        // Predicated region
        $region37: #{tpu_custom_call.1} parent=31 // pred_check
          %p210 = pneg %p70
        $region38: #{tpu_custom_call.1} parent=31 // pred_check_branch
          %212 = sbr.rel (%p210) target = $region40
        $region39: #{tpu_custom_call.1} parent=31 // pred_region
          %214 = dma.done %s206, 512
        $region40: #{tpu_custom_call.1} parent=31 // pred_fallthru
          _
        %s215 = sand.u32 %s31, 1
        %s216 = scalar_lea.sflag [#allocation3], %s215
        %s217 = sand.u32 %s31, 1
        %s218 = smul.addr %s217, 32
        %s219 = scalar_lea.vmem [#allocation2], %s218
        %p220 = pneg %p44
        %p221 = pneg %p41
        %s222 = sand.u32 %s57, 1
        %s223 = scalar_lea.sflag [#allocation6], %s222
        %s224 = sand.u32 %s57, 1
        %s225 = smul.addr %s224, 32
        %s226 = scalar_lea.vmem [#allocation5], %s225
        %p227 = pneg %p70
        %p228 = pneg %p67
        %p229 = scmp.lt.s32.totalorder %s23, 1
        %s230 = scalar_select %p229, %s23, 1
        %s231 = smul.addr %s230, 4
        %s232 = scalar_lea.vmem %s2, %s231
        %p233 = pneg %p96
        %p234 = pneg %p93
        %p235 = pneg %p122
        %p236 = pneg %p119
        %s237 = sand.u32 %s109, 1
        %s238 = scalar_lea.sflag [#allocation4], %s237
        %s239 = sand.u32 %s109, 1
        %s240 = scalar_lea.vmem [#allocation7], %s239
        %p241 = scmp.lt.s32.totalorder %s23, 1
        %s242 = scalar_select %p241, %s23, 1
        %s243 = smul.addr %s242, 4
        %s244 = scalar_lea.vmem %s2, %s243
        %v245 = vld [vmem:[%s199] sm:$0xff]
        %v246 = vld [vmem:[%s199 + $0x8] sm:$0xff]
        %v247 = vld [vmem:[%s199 + $0x10] sm:$0xff]
        %v248 = vld [vmem:[%s199 + $0x18] sm:$0xff]
        %v249 = vld [vmem:[%s209] sm:$0xff]
        %v250 = vld [vmem:[%s209 + $0x8] sm:$0xff]
        %v251 = vld [vmem:[%s209 + $0x10] sm:$0xff]
        %v252 = vld [vmem:[%s209 + $0x18] sm:$0xff]
        %v253 = vld [vmem:[%s244] sm:$0xf]
        %v254 = vlaneseq
        %v255 = vand.u32 %v254, 127
        %v256 = vadd.s32 %v255, 128
        %v257 = vadd.s32 %v255, 256
        %v258 = vadd.s32 %v255, 384
        %v259 = vadd.s32 %v255, 512
        %v260 = vadd.s32 %v255, 640
        %v261 = vadd.s32 %v255, 768
        %v262 = vadd.s32 %v255, 896
        %267 = vst [vmem:[#allocation1] ss:$2 sm:$0xff] %v245
        %s268 = scalar_lea.vmem [#allocation1], 16
        %269 = vst [vmem:[%s268] ss:$2 sm:$0xff] %v246
        %s270 = scalar_lea.vmem [#allocation1], 32
        %271 = vst [vmem:[%s270] ss:$2 sm:$0xff] %v247
        %s272 = scalar_lea.vmem [#allocation1], 48
        %273 = vst [vmem:[%s272] ss:$2 sm:$0xff] %v248
        %v274 = vld.sshfl [vmem:[#allocation1] sm:$0xff pattern:$0x75316420]
        %v275 = vld.sshfl [vmem:[#allocation1 + $0x8] sm:$0xff pattern:$0x75316420]
        %v276 = vld.sshfl [vmem:[#allocation1 + $0x10] sm:$0xff pattern:$0x75316420]
        %v277 = vld.sshfl [vmem:[#allocation1 + $0x18] sm:$0xff pattern:$0x75316420]
        %v278 = vld.sshfl [vmem:[#allocation1 + $0x20] sm:$0xff pattern:$0x75316420]
        %v279 = vld.sshfl [vmem:[#allocation1 + $0x28] sm:$0xff pattern:$0x75316420]
        %v280 = vld.sshfl [vmem:[#allocation1 + $0x30] sm:$0xff pattern:$0x75316420]
        %v281 = vld.sshfl [vmem:[#allocation1 + $0x38] sm:$0xff pattern:$0x75316420]
        %vm290 = vcmask 1043456
        %v291 = vsel %vm290, %v274, -inf
        %v292 = vsel %vm290, %v275, -inf
        %v293 = vsel %vm290, %v276, -inf
        %v294 = vsel %vm290, %v277, -inf
        %v295 = vsel %vm290, %v278, -inf
        %v296 = vmax.f32 %v291, %v295
        %v297 = vsel %vm290, %v279, -inf
        %v298 = vmax.f32 %v292, %v297
        %v299 = vsel %vm290, %v280, -inf
        %v300 = vmax.f32 %v293, %v299
        %v301 = vsel %vm290, %v281, -inf
        %v302 = vmax.f32 %v294, %v301
        %v303 = vmax.f32 %v296, %v298
        %v304 = vmax.f32 %v300, %v302
        %v305 = vmax.f32 %v303, %v304
        %306 = vmax.xlane.f32.xlu0 %v305
        %v307 = vpop.xlane.xlu0 %306
        %v310 = vunpack.c.l.s4 839922192
        %v311 = vunpack.c.0.s8 %v310
        %v312 = vperm.slane %v307, %v311
        %vm314 = vcmp.eq.f32.partialorder %v245, %v312
        %vm315 = vcmp.eq.f32.partialorder %v246, %v312
        %vm316 = vcmp.eq.f32.partialorder %v247, %v312
        %vm317 = vcmp.eq.f32.partialorder %v248, %v312
        %v318 = vrot.slane %v256, 4
        %v319 = vrot.slane %v258, 4
        %v320 = vrot.slane %v260, 4
        %v321 = vrot.slane %v262, 4
        %v322 = vsel %vm290, %v255, %v318
        %v323 = vsel %vm290, %v257, %v319
        %v324 = vsel %vm290, %v259, %v320
        %v325 = vsel %vm290, %v261, %v321
        %v326 = vsel %vm314, %v322, 1024
        %v327 = vsel %vm315, %v323, 1024
        %v328 = vsel %vm316, %v324, 1024
        %v329 = vsel %vm317, %v325, 1024
        %330 = vst [vmem:[#allocation1] ss:$2 sm:$0xff] %v326
        %s331 = scalar_lea.vmem [#allocation1], 16
        %332 = vst [vmem:[%s331] ss:$2 sm:$0xff] %v327
        %s333 = scalar_lea.vmem [#allocation1], 32
        %334 = vst [vmem:[%s333] ss:$2 sm:$0xff] %v328
        %s335 = scalar_lea.vmem [#allocation1], 48
        %336 = vst [vmem:[%s335] ss:$2 sm:$0xff] %v329
        %v337 = vld.sshfl [vmem:[#allocation1] sm:$0xff pattern:$0x75316420]
        %v338 = vld.sshfl [vmem:[#allocation1 + $0x8] sm:$0xff pattern:$0x75316420]
        %v339 = vld.sshfl [vmem:[#allocation1 + $0x10] sm:$0xff pattern:$0x75316420]
        %v340 = vld.sshfl [vmem:[#allocation1 + $0x18] sm:$0xff pattern:$0x75316420]
        %v341 = vld.sshfl [vmem:[#allocation1 + $0x20] sm:$0xff pattern:$0x75316420]
        %v342 = vld.sshfl [vmem:[#allocation1 + $0x28] sm:$0xff pattern:$0x75316420]
        %v343 = vld.sshfl [vmem:[#allocation1 + $0x30] sm:$0xff pattern:$0x75316420]
        %v344 = vld.sshfl [vmem:[#allocation1 + $0x38] sm:$0xff pattern:$0x75316420]
        %v345 = vsel %vm290, %v337, 2147483647
        %v346 = vsel %vm290, %v338, 2147483647
        %v347 = vsel %vm290, %v339, 2147483647
        %v348 = vsel %vm290, %v340, 2147483647
        %v349 = vsel %vm290, %v341, 2147483647
        %vm350 = vcmp.lt.s32.totalorder %v345, %v349
        %v351 = vsel %vm350, %v345, %v349
        %v352 = vsel %vm290, %v342, 2147483647
        %vm353 = vcmp.lt.s32.totalorder %v346, %v352
        %v354 = vsel %vm353, %v346, %v352
        %v355 = vsel %vm290, %v343, 2147483647
        %vm356 = vcmp.lt.s32.totalorder %v347, %v355
        %v357 = vsel %vm356, %v347, %v355
        %v358 = vsel %vm290, %v344, 2147483647
        %vm359 = vcmp.lt.s32.totalorder %v348, %v358
        %v360 = vsel %vm359, %v348, %v358
        %vm361 = vcmp.lt.s32.totalorder %v351, %v354
        %v362 = vsel %vm361, %v351, %v354
        %vm363 = vcmp.lt.s32.totalorder %v357, %v360
        %v364 = vsel %vm363, %v357, %v360
        %vm365 = vcmp.lt.s32.totalorder %v362, %v364
        %v366 = vsel %vm365, %v362, %v364
        %v367 = vand.u32 %v366, 65535
        %v368 = vshra.s32 %v366, 16
        %v369 = vcvt.s32.f32 %v367
        %v370 = vcvt.s32.f32 %v368
        %371 = vmin.xlane.f32.xlu0 %v370
        %v372 = vpop.xlane.xlu0 %371
        %vm373 = vcmp.eq.f32.partialorder %v370, %v372
        %v374 = vsel %vm373, %v369, inf
        %375 = vmin.xlane.f32.xlu0 %v374
        %v376 = vpop.xlane.xlu0 %375
        %v377 = vcvt.f32.s32 %v376
        %v378 = vcvt.f32.s32 %v372
        %v379 = vshll.u32 %v378, 16
        %v380 = vadd.s32 %v379, %v377
        %vm381 = vcmp.gt.f32.partialorder %v307, 0.0
        %v382 = vand.u32 %v380, 31
        %v383 = vshra.s32 %v380, 5
        %v384 = vand.u32 %v255, 31
        %v385 = vand.u32 %v256, 31
        %v386 = vand.u32 %v257, 31
        %v387 = vand.u32 %v258, 31
        %v388 = vand.u32 %v259, 31
        %v389 = vand.u32 %v260, 31
        %v390 = vand.u32 %v261, 31
        %v391 = vand.u32 %v262, 31
        %v392 = vshra.s32 %v255, 5
        %v393 = vshra.s32 %v256, 5
        %v394 = vshra.s32 %v257, 5
        %v395 = vshra.s32 %v258, 5
        %v396 = vshra.s32 %v259, 5
        %v397 = vshra.s32 %v260, 5
        %v398 = vshra.s32 %v261, 5
        %v399 = vshra.s32 %v262, 5
        %v400 = vsel %vm381, %v382, 0
        %v401 = vsel %vm381, %v383, 0
        %v402 = vsub.s32 %v384, %v400
        %v403 = vsub.s32 %v385, %v400
        %v404 = vsub.s32 %v386, %v400
        %v405 = vsub.s32 %v387, %v400
        %v406 = vsub.s32 %v388, %v400
        %v407 = vsub.s32 %v389, %v400
        %v408 = vsub.s32 %v390, %v400
        %v409 = vsub.s32 %v391, %v400
        %v410 = vsub.s32 %v392, %v401
        %v411 = vsub.s32 %v393, %v401
        %v412 = vsub.s32 %v394, %v401
        %v413 = vsub.s32 %v395, %v401
        %v414 = vsub.s32 %v396, %v401
        %v415 = vsub.s32 %v397, %v401
        %v416 = vsub.s32 %v398, %v401
        %v417 = vsub.s32 %v399, %v401
        %v418 = vmul.u32 %v402, %v402
        %v419 = vmul.u32 %v403, %v403
        %v420 = vmul.u32 %v404, %v404
        %v421 = vmul.u32 %v405, %v405
        %v422 = vmul.u32 %v406, %v406
        %v423 = vmul.u32 %v407, %v407
        %v424 = vmul.u32 %v408, %v408
        %v425 = vmul.u32 %v409, %v409
        %v426 = vmul.u32 %v410, %v410
        %v427 = vmul.u32 %v411, %v411
        %v428 = vmul.u32 %v412, %v412
        %v429 = vmul.u32 %v413, %v413
        %v430 = vmul.u32 %v414, %v414
        %v431 = vmul.u32 %v415, %v415
        %v432 = vmul.u32 %v416, %v416
        %v433 = vmul.u32 %v417, %v417
        %vm434 = vcmp.le.s32.totalorder %v418, 36
        %vm435 = vcmp.le.s32.totalorder %v419, 36
        %vm436 = vcmp.le.s32.totalorder %v420, 36
        %vm437 = vcmp.le.s32.totalorder %v421, 36
        %vm438 = vcmp.le.s32.totalorder %v422, 36
        %vm439 = vcmp.le.s32.totalorder %v423, 36
        %vm440 = vcmp.le.s32.totalorder %v424, 36
        %vm441 = vcmp.le.s32.totalorder %v425, 36
        %vm442 = vcmp.le.s32.totalorder %v426, 36
        %vm443 = vcmp.le.s32.totalorder %v427, 36
        %vm444 = vcmp.le.s32.totalorder %v428, 36
        %vm445 = vcmp.le.s32.totalorder %v429, 36
        %vm446 = vcmp.le.s32.totalorder %v430, 36
        %vm447 = vcmp.le.s32.totalorder %v431, 36
        %vm448 = vcmp.le.s32.totalorder %v432, 36
        %vm449 = vcmp.le.s32.totalorder %v433, 36
        %vm450 = vmand %vm434, %vm442
        %vm451 = vmand %vm435, %vm443
        %vm452 = vmand %vm436, %vm444
        %vm453 = vmand %vm437, %vm445
        %vm454 = vmand %vm438, %vm446
        %vm455 = vmand %vm439, %vm447
        %vm456 = vmand %vm440, %vm448
        %vm457 = vmand %vm441, %vm449
        %v458 = vadd.s32 %v418, %v426
        %v459 = vadd.s32 %v419, %v427
        %v460 = vadd.s32 %v420, %v428
        %v461 = vadd.s32 %v421, %v429
        %v462 = vadd.s32 %v422, %v430
        %v463 = vadd.s32 %v423, %v431
        %v464 = vadd.s32 %v424, %v432
        %v465 = vadd.s32 %v425, %v433
        %v466 = vcvt.s32.f32 %v458
        %v467 = vcvt.s32.f32 %v459
        %v468 = vcvt.s32.f32 %v460
        %v469 = vcvt.s32.f32 %v461
        %v470 = vcvt.s32.f32 %v462
        %v471 = vcvt.s32.f32 %v463
        %v472 = vcvt.s32.f32 %v464
        %v473 = vcvt.s32.f32 %v465
        %v474 = vmul.f32 %v466, -0.125
        %v475 = vmul.f32 %v467, -0.125
        %v476 = vmul.f32 %v468, -0.125
        %v477 = vmul.f32 %v469, -0.125
        %v478 = vmul.f32 %v470, -0.125
        %v479 = vmul.f32 %v471, -0.125
        %v480 = vmul.f32 %v472, -0.125
        %v481 = vmul.f32 %v473, -0.125
        %v482 = vmul.f32 %v474, 1.442695
        %v483 = vpow.pop %v482
        %v484 = vmul.f32 %v475, 1.442695
        %v485 = vpow.pop %v484
        %v486 = vmul.f32 %v476, 1.442695
        %v487 = vpow.pop %v486
        %v488 = vmul.f32 %v477, 1.442695
        %v489 = vpow.pop %v488
        %v490 = vmul.f32 %v478, 1.442695
        %v491 = vpow.pop %v490
        %v492 = vmul.f32 %v479, 1.442695
        %v493 = vpow.pop %v492
        %v494 = vmul.f32 %v480, 1.442695
        %v495 = vpow.pop %v494
        %v496 = vmul.f32 %v481, 1.442695
        %v497 = vpow.pop %v496
        %v498 = vsel %vm450, %v483, 0.0
        %v499 = vsel %vm451, %v485, 0.0
        %v500 = vsel %vm452, %v487, 0.0
        %v501 = vsel %vm453, %v489, 0.0
        %v502 = vsel %vm454, %v491, 0.0
        %v503 = vsel %vm455, %v493, 0.0
        %v504 = vsel %vm456, %v495, 0.0
        %v505 = vsel %vm457, %v497, 0.0
        %v506 = vmul.f32 %v498, %v474
        %v507 = vmul.f32 %v499, %v475
        %v508 = vmul.f32 %v500, %v476
        %v509 = vmul.f32 %v501, %v477
        %v510 = vmul.f32 %v502, %v478
        %v511 = vmul.f32 %v503, %v479
        %v512 = vmul.f32 %v504, %v480
        %v513 = vmul.f32 %v505, %v481
        %518 = vst [vmem:[#allocation1] ss:$2 sm:$0xff] %v249
        %s519 = scalar_lea.vmem [#allocation1], 16
        %520 = vst [vmem:[%s519] ss:$2 sm:$0xff] %v250
        %s521 = scalar_lea.vmem [#allocation1], 32
        %522 = vst [vmem:[%s521] ss:$2 sm:$0xff] %v251
        %s523 = scalar_lea.vmem [#allocation1], 48
        %524 = vst [vmem:[%s523] ss:$2 sm:$0xff] %v252
        %v525 = vld.sshfl [vmem:[#allocation1] sm:$0xff pattern:$0x75316420]
        %v526 = vld.sshfl [vmem:[#allocation1 + $0x8] sm:$0xff pattern:$0x75316420]
        %v527 = vld.sshfl [vmem:[#allocation1 + $0x10] sm:$0xff pattern:$0x75316420]
        %v528 = vld.sshfl [vmem:[#allocation1 + $0x18] sm:$0xff pattern:$0x75316420]
        %v529 = vld.sshfl [vmem:[#allocation1 + $0x20] sm:$0xff pattern:$0x75316420]
        %v530 = vld.sshfl [vmem:[#allocation1 + $0x28] sm:$0xff pattern:$0x75316420]
        %v531 = vld.sshfl [vmem:[#allocation1 + $0x30] sm:$0xff pattern:$0x75316420]
        %v532 = vld.sshfl [vmem:[#allocation1 + $0x38] sm:$0xff pattern:$0x75316420]
        %v541 = vsel %vm290, %v525, -inf
        %v542 = vsel %vm290, %v526, -inf
        %v543 = vsel %vm290, %v527, -inf
        %v544 = vsel %vm290, %v528, -inf
        %v545 = vsel %vm290, %v529, -inf
        %v546 = vmax.f32 %v541, %v545
        %v547 = vsel %vm290, %v530, -inf
        %v548 = vmax.f32 %v542, %v547
        %v549 = vsel %vm290, %v531, -inf
        %v550 = vmax.f32 %v543, %v549
        %v551 = vsel %vm290, %v532, -inf
        %v552 = vmax.f32 %v544, %v551
        %v553 = vmax.f32 %v546, %v548
        %v554 = vmax.f32 %v550, %v552
        %v555 = vmax.f32 %v553, %v554
        %556 = vmax.xlane.f32.xlu0 %v555
        %v557 = vpop.xlane.xlu0 %556
        %v560 = vunpack.c.l.s4 839922192
        %v561 = vunpack.c.0.s8 %v560
        %v562 = vperm.slane %v557, %v561
        %v564 = vsub.f32 %v249, %v562
        %v565 = vsub.f32 %v250, %v562
        %v566 = vsub.f32 %v251, %v562
        %v567 = vsub.f32 %v252, %v562
        %v568 = vmul.f32 %v564, 1.442695
        %v569 = vpow.pop %v568
        %v570 = vmul.f32 %v565, 1.442695
        %v571 = vpow.pop %v570
        %v572 = vmul.f32 %v566, 1.442695
        %v573 = vpow.pop %v572
        %v574 = vmul.f32 %v567, 1.442695
        %v575 = vpow.pop %v574
        %580 = vst [vmem:[#allocation1] ss:$2 sm:$0xff] %v569
        %s581 = scalar_lea.vmem [#allocation1], 16
        %582 = vst [vmem:[%s581] ss:$2 sm:$0xff] %v571
        %s583 = scalar_lea.vmem [#allocation1], 32
        %584 = vst [vmem:[%s583] ss:$2 sm:$0xff] %v573
        %s585 = scalar_lea.vmem [#allocation1], 48
        %586 = vst [vmem:[%s585] ss:$2 sm:$0xff] %v575
        %v587 = vld.sshfl [vmem:[#allocation1] sm:$0xff pattern:$0x75316420]
        %v588 = vld.sshfl [vmem:[#allocation1 + $0x8] sm:$0xff pattern:$0x75316420]
        %v589 = vld.sshfl [vmem:[#allocation1 + $0x10] sm:$0xff pattern:$0x75316420]
        %v590 = vld.sshfl [vmem:[#allocation1 + $0x18] sm:$0xff pattern:$0x75316420]
        %v591 = vld.sshfl [vmem:[#allocation1 + $0x20] sm:$0xff pattern:$0x75316420]
        %v592 = vld.sshfl [vmem:[#allocation1 + $0x28] sm:$0xff pattern:$0x75316420]
        %v593 = vld.sshfl [vmem:[#allocation1 + $0x30] sm:$0xff pattern:$0x75316420]
        %v594 = vld.sshfl [vmem:[#allocation1 + $0x38] sm:$0xff pattern:$0x75316420]
        %v603 = vsel %vm290, %v587, 0.0
        %v604 = vsel %vm290, %v588, 0.0
        %v605 = vadd.f32 %v603, %v604
        %v606 = vsel %vm290, %v589, 0.0
        %v607 = vadd.f32 %v605, %v606
        %v608 = vsel %vm290, %v590, 0.0
        %v609 = vadd.f32 %v607, %v608
        %v610 = vsel %vm290, %v591, 0.0
        %v611 = vadd.f32 %v609, %v610
        %v612 = vsel %vm290, %v592, 0.0
        %v613 = vadd.f32 %v611, %v612
        %v614 = vsel %vm290, %v593, 0.0
        %v615 = vadd.f32 %v613, %v614
        %v616 = vsel %vm290, %v594, 0.0
        %v617 = vadd.f32 %v615, %v616
        %618 = vadd.xlane.f32.xlu0 %v617
        %v619 = vpop.xlane.xlu0 %618
        %v620 = vlog2.pop %v619
        %v621 = vmul.f32 %v620, 0.6931472
        %v622 = vsel %vm290, %v498, 0.0
        %v623 = vsel %vm290, %v499, 0.0
        %v624 = vadd.f32 %v622, %v623
        %v625 = vsel %vm290, %v500, 0.0
        %v626 = vadd.f32 %v624, %v625
        %v627 = vsel %vm290, %v501, 0.0
        %v628 = vadd.f32 %v626, %v627
        %v629 = vsel %vm290, %v502, 0.0
        %v630 = vadd.f32 %v628, %v629
        %v631 = vsel %vm290, %v503, 0.0
        %v632 = vadd.f32 %v630, %v631
        %v633 = vsel %vm290, %v504, 0.0
        %v634 = vadd.f32 %v632, %v633
        %v635 = vsel %vm290, %v505, 0.0
        %v636 = vadd.f32 %v634, %v635
        %637 = vadd.xlane.f32.xlu0 %v636
        %v638 = vpop.xlane.xlu0 %637
        %643 = vst [vmem:[#allocation1] ss:$2 sm:$0xff] %v564
        %s644 = scalar_lea.vmem [#allocation1], 16
        %645 = vst [vmem:[%s644] ss:$2 sm:$0xff] %v565
        %s646 = scalar_lea.vmem [#allocation1], 32
        %647 = vst [vmem:[%s646] ss:$2 sm:$0xff] %v566
        %s648 = scalar_lea.vmem [#allocation1], 48
        %649 = vst [vmem:[%s648] ss:$2 sm:$0xff] %v567
        %v650 = vld.sshfl [vmem:[#allocation1] sm:$0xff pattern:$0x75316420]
        %v651 = vld.sshfl [vmem:[#allocation1 + $0x8] sm:$0xff pattern:$0x75316420]
        %v652 = vld.sshfl [vmem:[#allocation1 + $0x10] sm:$0xff pattern:$0x75316420]
        %v653 = vld.sshfl [vmem:[#allocation1 + $0x18] sm:$0xff pattern:$0x75316420]
        %v654 = vld.sshfl [vmem:[#allocation1 + $0x20] sm:$0xff pattern:$0x75316420]
        %v655 = vld.sshfl [vmem:[#allocation1 + $0x28] sm:$0xff pattern:$0x75316420]
        %v656 = vld.sshfl [vmem:[#allocation1 + $0x30] sm:$0xff pattern:$0x75316420]
        %v657 = vld.sshfl [vmem:[#allocation1 + $0x38] sm:$0xff pattern:$0x75316420]
        %v666 = vmul.f32 %v498, %v650
        %v667 = vmul.f32 %v499, %v651
        %v668 = vmul.f32 %v500, %v652
        %v669 = vmul.f32 %v501, %v653
        %v670 = vmul.f32 %v502, %v654
        %v671 = vmul.f32 %v503, %v655
        %v672 = vmul.f32 %v504, %v656
        %v673 = vmul.f32 %v505, %v657
        %v674 = vsel %vm290, %v666, 0.0
        %v675 = vsel %vm290, %v667, 0.0
        %v676 = vadd.f32 %v674, %v675
        %v677 = vsel %vm290, %v668, 0.0
        %v678 = vadd.f32 %v676, %v677
        %v679 = vsel %vm290, %v669, 0.0
        %v680 = vadd.f32 %v678, %v679
        %v681 = vsel %vm290, %v670, 0.0
        %v682 = vadd.f32 %v680, %v681
        %v683 = vsel %vm290, %v671, 0.0
        %v684 = vadd.f32 %v682, %v683
        %v685 = vsel %vm290, %v672, 0.0
        %v686 = vadd.f32 %v684, %v685
        %v687 = vsel %vm290, %v673, 0.0
        %v688 = vadd.f32 %v686, %v687
        %689 = vadd.xlane.f32.xlu0 %v688
        %v690 = vpop.xlane.xlu0 %689
        %v691 = vsel %vm290, %v506, 0.0
        %v692 = vsel %vm290, %v507, 0.0
        %v693 = vadd.f32 %v691, %v692
        %v694 = vsel %vm290, %v508, 0.0
        %v695 = vadd.f32 %v693, %v694
        %v696 = vsel %vm290, %v509, 0.0
        %v697 = vadd.f32 %v695, %v696
        %v698 = vsel %vm290, %v510, 0.0
        %v699 = vadd.f32 %v697, %v698
        %v700 = vsel %vm290, %v511, 0.0
        %v701 = vadd.f32 %v699, %v700
        %v702 = vsel %vm290, %v512, 0.0
        %v703 = vadd.f32 %v701, %v702
        %v704 = vsel %vm290, %v513, 0.0
        %v705 = vadd.f32 %v703, %v704
        %706 = vadd.xlane.f32.xlu0 %v705
        %v707 = vpop.xlane.xlu0 %706
        %v708 = vsub.f32 %v707, %v690
        %v709 = vmul.f32 %v621, %v638
        %v710 = vadd.f32 %v708, %v709
        %v711 = vmul.f32 %v710, %v253
        %vm712 = vcmask 3072
        %v713 = vsel %vm712, %v711, 0.0
        %714 = vadd.xlane.f32.xlu0 %v713
        %v715 = vpop.xlane.xlu0 %714
        %v716 = vrot.slane %v715, 4
        %v717 = vadd.f32 %v715, %v716
        %v718 = vrot.slane %v717, 2
        %v719 = vadd.f32 %v717, %v718
        %v720 = vrot.slane %v719, 1
        %v721 = vadd.f32 %v719, %v720
        %s722 = vtos %v721
        %v723 = vstv %s722
        %724 = vst [vmem:[%s240] sm:$0x1] %v723
        %s725 = sand.u32 %s109, 1
        %s726 = scalar_lea.sflag [#allocation4], %s725
        %s727 = sand.u32 %s109, 1
        %s728 = scalar_lea.vmem [#allocation7], %s727
        // Predicated region
        $region41: #{tpu_custom_call.1} parent=31 // pred_check
          %p729 = pneg %p119
        $region42: #{tpu_custom_call.1} parent=31 // pred_check_branch
          %731 = sbr.rel (%p729) target = $region44
        $region43: #{tpu_custom_call.1} parent=31 // pred_region
          %733 = vsyncadd %s726, 0
          %s734 = scalar_lea.hbm %s3, %s23
          %s736 = sshll.u32 %s728, 4
          %s737 = int_to_ptr.vmem [resolvable:$true] %s736
          %s738 = sshll.u32 %s734, 4
          %s739 = int_to_ptr.hbm [resolvable:$true] %s738
          %741 = dma.vmem_to_hbm [thread:$0]  %s737, 16, %s739, %s726
        $region44: #{tpu_custom_call.1} parent=31 // pred_fallthru
          _
      $region32: #{tpu_custom_call.1} parent=5 // pred_fallthru
        _
      %p742 = scmp.le.s32.totalorder 2, %s18
      // Predicated region
      $region45: #{tpu_custom_call.1} parent=5 // pred_check
        %p743 = pneg %p742
      $region46: #{tpu_custom_call.1} parent=5 // pred_check_branch
        %745 = sbr.rel (%p743) target = $region48
      $region47: #{tpu_custom_call.1} parent=5 // pred_region
        %s746 = ssub.s32 %s18, 2
        // Predicated region
        $region49: #{tpu_custom_call.1} parent=47 // pred_check
          %p747 = pneg %p125
        $region50: #{tpu_custom_call.1} parent=47 // pred_check_branch
          %749 = sbr.rel (%p747) target = $region52
        $region51: #{tpu_custom_call.1} parent=47 // pred_region
          %s750 = sand.u32 %s110, 1
          %s751 = scalar_lea.sflag [#allocation4], %s750
          %s752 = sand.u32 %s110, 1
          %s753 = scalar_lea.vmem [#allocation7], %s752
          %755 = dma.done %s751, 16
        $region52: #{tpu_custom_call.1} parent=47 // pred_fallthru
          _
      $region48: #{tpu_custom_call.1} parent=5 // pred_fallthru
        _
    $region6: #{tpu_custom_call.1} parent=1 // loop_footer
      %s22 = sadd.s32 1, %s18
    $region7: #{tpu_custom_call.1} parent=1 // loop_footer_branch
      %17 = sbr.rel target = $region3
    $region8: #{tpu_custom_call.1} parent=1 // loop_exit
      _
    %756 = vsyncpa [#allocation3], 1
    %s757 = scalar_lea.sflag [#allocation3], 1
    %758 = vsyncpa %s757, 1
    %759 = vsyncpa [#allocation6], 1
    %s760 = scalar_lea.sflag [#allocation6], 1
    %761 = vsyncpa %s760, 1
    %762 = vsyncpa [#allocation4], 1
    %s763 = scalar_lea.sflag [#allocation4], 1
    %764 = vsyncpa %s763, 1

</llo_original>
